<compile_context>
chip_gen: v7x
topology: tpu7x:2x2x1
jax: 0.10.0
libtpu: 0.0.40
codegen_flags: <defaults>
</compile_context>

<pallas_src>
import functools

import jax
import jax.numpy as jnp
from jax.experimental import pallas as pl
from jax.experimental.pallas import tpu as pltpu


# ----------------------------- config (small, synthetic) ---------------------
BATCH = 2
SEQ = 8
HIDDEN = 32          # config.hidden_size
EPS = 1e-6

# Combined (input tile + output tile) bytes targeted per grid step.
_TARGET_TILE_BYTES = 16 << 20  # 16 MiB -> ~32 MiB double-buffered, fits v7x VMEM.


def _sublane_multiple(dtype) -> int:
    """Minimum row multiple for dense sublane packing of `dtype`."""
    bits = jnp.dtype(dtype).itemsize * 8
    return max(8, 256 // bits)     # 8 for 32-bit, 16 for 16-bit, 32 for 8-bit


def _rmsnorm_kernel(x_ref, w_ref, o_ref, *, eps):
    """One grid step == one block of rows.

    x_ref : (R, D)  hidden states block (input dtype)
    w_ref : (1, D)  RMSNorm weight (broadcast over rows, resident)
    o_ref : (R, D)  output block (promoted dtype)
    """
    x = x_ref[...].astype(jnp.float32)                       # (R, D) fp32
    variance = jnp.mean(x * x, axis=-1, keepdims=True)       # (R, 1) XLU reduce
    inv_rms = jax.lax.rsqrt(variance + eps)                  # EUP slot
    y = (x * inv_rms).astype(x_ref.dtype)                    # back to input dtype first,
    o_ref[...] = (w_ref[...] * y).astype(o_ref.dtype)        # then weight * (torch order)


def mllama_text_rmsnorm(hidden_states, weight, eps=EPS, block_rows=None):
    """hidden_states: (..., D); weight: (D,). Output dtype = promote(x, weight)."""
    orig_shape = hidden_states.shape
    D = orig_shape[-1]
    x2d = hidden_states.reshape(-1, D)                       # (N, D), lane axis = D
    N = x2d.shape[0]

    in_dtype = x2d.dtype
    out_dtype = jnp.promote_types(in_dtype, weight.dtype)
    in_isz = jnp.dtype(in_dtype).itemsize
    out_isz = jnp.dtype(out_dtype).itemsize

    # Sublane packing: the block row count must pack densely for both the
    # input tile layout and the output tile layout.
    row_mult = max(_sublane_multiple(in_dtype), _sublane_multiple(out_dtype))

    # --- pick a production-sized row block -----------------------------------
    if block_rows is None:
        bytes_per_row = D * (in_isz + out_isz)
        block_rows = max(row_mult, _TARGET_TILE_BYTES // bytes_per_row)
    block_rows = int(min(block_rows, N))
    if block_rows < N:
        # Partial-extent blocks must satisfy sublane tiling.
        block_rows = max(row_mult, (block_rows // row_mult) * row_mult)
    # (block_rows == N is always legal: block equals the full array extent.)

    # Pad rows so the grid divides evenly (zero rows are harmless: rsqrt(eps)).
    pad = (-N) % block_rows
    if pad:
        x2d = jnp.pad(x2d, ((0, pad), (0, 0)))
    n_rows = N + pad

    w2d = weight.reshape(1, D)                                # 2-D for TPU layout

    # --- VMEM budget: 2 buffers x (in tile + out tile) + weight + headroom ---
    in_tile_b = block_rows * D * in_isz
    out_tile_b = block_rows * D * out_isz
    w_b = D * jnp.dtype(weight.dtype).itemsize
    vmem_limit = 2 * (in_tile_b + out_tile_b) + 2 * w_b + (2 << 20)
    vmem_limit = max(vmem_limit, 4 << 20)

    grid = (n_rows // block_rows,)
    out2d = pl.pallas_call(
        functools.partial(_rmsnorm_kernel, eps=eps),
        out_shape=jax.ShapeDtypeStruct((n_rows, D), out_dtype),
        grid_spec=pltpu.PrefetchScalarGridSpec(
            num_scalar_prefetch=0,
            grid=grid,
            in_specs=[
                pl.BlockSpec((block_rows, D), lambda i: (i, 0)),   # hidden rows
                pl.BlockSpec((1, D), lambda i: (0, 0)),            # weight (resident)
            ],
            out_specs=pl.BlockSpec((block_rows, D), lambda i: (i, 0)),
        ),
        compiler_params=pltpu.CompilerParams(
            dimension_semantics=("parallel",),      # shards row blocks across TCs (v7x)
            vmem_limit_bytes=int(vmem_limit),
        ),
    )(x2d, w2d)

    if pad:
        out2d = out2d[:N]
    return out2d.reshape(orig_shape[:-1] + (D,))


def _reference(hidden_states, weight, eps=EPS):
    """Plain-JAX replica of the PyTorch forward for verification."""
    input_dtype = hidden_states.dtype
    x = hidden_states.astype(jnp.float32)
    variance = jnp.mean(x * x, axis=-1, keepdims=True)
    y = x * jax.lax.rsqrt(variance + eps)
    return weight * y.astype(input_dtype)     # promotes with weight dtype, like torch


if __name__ == "__main__":
    key = jax.random.PRNGKey(0)
    k_x, k_w = jax.random.split(key, 2)

    # --- primary small test: fp32 activations, fp32 weight -------------------
    hidden_states = jax.random.normal(k_x, (BATCH, SEQ, HIDDEN), jnp.float32)
    # Module initializes weight to ones; perturb a little so the test is non-trivial.
    weight = 1.0 + 0.1 * jax.random.normal(k_w, (HIDDEN,), jnp.float32)

    out = mllama_text_rmsnorm(hidden_states, weight)
    jax.block_until_ready(out)

    ref = _reference(hidden_states, weight)
    assert out.shape == ref.shape and out.dtype == ref.dtype
    assert jnp.allclose(out, ref, atol=1e-5, rtol=1e-5)

    # --- mixed-dtype check: bf16 activations, fp32 weight (promoted output) --
    hs_bf16 = hidden_states.astype(jnp.bfloat16)
    out_bf = mllama_text_rmsnorm(hs_bf16, weight)
    jax.block_until_ready(out_bf)
    ref_bf = _reference(hs_bf16, weight)
    assert out_bf.shape == ref_bf.shape and out_bf.dtype == ref_bf.dtype  # fp32
    assert jnp.allclose(out_bf.astype(jnp.float32),
                        ref_bf.astype(jnp.float32), atol=2e-2, rtol=2e-2)

    print("KERNEL_OK")
</pallas_src>

<mosaic_0001>
module attributes {stable_mosaic.version = 11 : i64} {
  func.func @_rmsnorm_kernel(%arg0: i32, %arg1: memref<16x32xf32, #tpu.memory_space<vmem>>, %arg2: memref<1x32xf32, #tpu.memory_space<vmem>>, %arg3: memref<16x32xf32, #tpu.memory_space<vmem>>) attributes {dimension_semantics = [#tpu.dimension_semantics<parallel>], iteration_bounds = array<i64: 1>, scalar_prefetch = 0 : i64, scratch_operands = 0 : i64, tpu.core_type = #tpu.core_type<tc>, window_params = [{transform_indices = @transform_0, window_bounds = array<i64: 16, 32>}, {pipeline_mode = #tpu.pipeline_mode<synchronous>, transform_indices = @transform_1, window_bounds = array<i64: 1, 32>}, {transform_indices = @transform_2, window_bounds = array<i64: 16, 32>}]} {
    %c0 = arith.constant 0 : index
    %c0_0 = arith.constant 0 : index
    %0 = vector.load %arg1[%c0, %c0_0] : memref<16x32xf32, #tpu.memory_space<vmem>>, vector<16x32xf32>
    %1 = arith.mulf %0, %0 : vector<16x32xf32>
    %cst = arith.constant dense<0.000000e+00> : vector<16xf32>
    %2 = vector.multi_reduction <add>, %1, %cst [1] : vector<16x32xf32> to vector<16xf32>
    %3 = vector.shape_cast %2 : vector<16xf32> to vector<16x1xf32>
    %cst_1 = arith.constant 3.200000e+01 : f32
    %4 = vector.broadcast %cst_1 : f32 to vector<16x1xf32>
    %5 = arith.divf %3, %4 : vector<16x1xf32>
    %cst_2 = arith.constant 9.99999997E-7 : f32
    %6 = vector.broadcast %cst_2 : f32 to vector<16x1xf32>
    %7 = arith.addf %5, %6 : vector<16x1xf32>
    %8 = math.rsqrt %7 : vector<16x1xf32>
    %9 = vector.broadcast %8 : vector<16x1xf32> to vector<16x32xf32>
    %10 = arith.mulf %0, %9 : vector<16x32xf32>
    %c0_3 = arith.constant 0 : index
    %c0_4 = arith.constant 0 : index
    %11 = vector.load %arg2[%c0_3, %c0_4] : memref<1x32xf32, #tpu.memory_space<vmem>>, vector<1x32xf32>
    %12 = vector.broadcast %11 : vector<1x32xf32> to vector<16x32xf32>
    %13 = arith.mulf %12, %10 : vector<16x32xf32>
    %c0_5 = arith.constant 0 : index
    %c0_6 = arith.constant 0 : index
    %14 = vector.load %arg3[%c0_5, %c0_6] : memref<16x32xf32, #tpu.memory_space<vmem>>, vector<16x32xf32>
    tpu.vector_store %arg3[%c0_5, %c0_6], %13 {strides = array<i32>} : memref<16x32xf32, #tpu.memory_space<vmem>>, vector<16x32xf32>,
    return
  }
  func.func @transform_0(%arg0: i32) -> (i32, i32) {
    %c0_i32 = arith.constant 0 : i32
    %c0_i32_0 = arith.constant 0 : i32
    return %arg0, %c0_i32 : i32, i32
  }
  func.func @transform_1(%arg0: i32) -> (i32, i32) {
    %c0_i32 = arith.constant 0 : i32
    %c0_i32_0 = arith.constant 0 : i32
    %c0_i32_1 = arith.constant 0 : i32
    return %c0_i32, %c0_i32_0 : i32, i32
  }
  func.func @transform_2(%arg0: i32) -> (i32, i32) {
    %c0_i32 = arith.constant 0 : i32
    %c0_i32_0 = arith.constant 0 : i32
    return %arg0, %c0_i32 : i32, i32
  }
}

</mosaic_0001>

<llo_original>
// kernel: tpu_custom_call.1
$region0: #{tpu_custom_call.1}
  #allocation0 [shape = 'u32[]', space=smem, size = 0x4, offset = 0x4, fixed_abs, tag = 'smem constant byte address 0x4 - core index']
  #allocation1 [shape = 'u32[144,128]{1,0:T(1,128)}', space=vmem, size = 0x12000, scoped, tag = 'internal scratch']
  %s0 = inlined_call_operand.hbm [shape: f32[16,32], index: 0, kind: input, shape index: {}]
  %s1 = inlined_call_operand.vmem [shape: f32[1,32], index: 1, kind: input, shape index: {}]
  %s2 = inlined_call_operand.hbm [shape: f32[16,32], index: 2, kind: output, shape index: {}]
  %s3 = sld [smem:[#allocation0]]
  $region22: #{tpu_custom_call.1} parent=0
    _
  %s5 = ssub.s32 1, %s3
  %s6 = scalar_select 0, %s5, %s3
  $region1: #{tpu_custom_call.1} parent=0
    #allocation2 [shape = 'u8[8192]{0}', space=vmem, size = 0x2000, scoped, tag = 'input window, operand 0, single buffered']
    #allocation3 [shape = 's32[1]{0}', space=sflag, size = 0x4, scoped, tag = 'scoped memory for tpu_custom_call.1']
    #allocation4 [shape = 's32[1]{0}', space=sflag, size = 0x4, scoped, tag = 'scoped memory for tpu_custom_call.1']
    #allocation5 [shape = 'u8[8192]{0}', space=vmem, size = 0x2000, scoped, tag = 'output window, operand 0, single buffered']
    %7 = vsyncpa [#allocation3], 0
    %8 = vsyncpa [#allocation4], 0
    // Predicated region
    $region2: #{tpu_custom_call.1} parent=1 // pred_check
      _
    $region3: #{tpu_custom_call.1} parent=1 // pred_check_branch
      %10 = sbr.rel (0) target = $region5
    $region4: #{tpu_custom_call.1} parent=1 // pred_region
      %s12 = ssub.s32 256, 256
      %13 = vsyncadd [#allocation3], %s12
      %s14 = sshll.u32 [#allocation2], 4
      %s15 = int_to_ptr.vmem [resolvable:$true] %s14
      %20 = dma.hbm_to_vmem [thread:$0]  %s0, 256, %s15, [#allocation3], 128, 128, 8
    $region5: #{tpu_custom_call.1} parent=1 // pred_fallthru
      _
    // Predicated region
    $region6: #{tpu_custom_call.1} parent=1 // pred_check
      _
    $region7: #{tpu_custom_call.1} parent=1 // pred_check_branch
      %22 = sbr.rel (0) target = $region9
    $region8: #{tpu_custom_call.1} parent=1 // pred_region
      _
    $region9: #{tpu_custom_call.1} parent=1 // pred_fallthru
      _
    // Predicated region
    $region10: #{tpu_custom_call.1} parent=1 // pred_check
      _
    $region11: #{tpu_custom_call.1} parent=1 // pred_check_branch
      %24 = sbr.rel (0) target = $region13
    $region12: #{tpu_custom_call.1} parent=1 // pred_region
      %25 = dma.done [#allocation3], 256
    $region13: #{tpu_custom_call.1} parent=1 // pred_fallthru
      _
    %v26 = vld [vmem:[#allocation2] sm:$0xff]
    %v27 = vld [vmem:[#allocation2 + $0x8] sm:$0xff]
    %v28 = vmul.f32 %v26, %v26
    %v29 = vmul.f32 %v27, %v27
    %vm30 = vcmask 261120
    %v31 = vsel %vm30, %v28, 0.0
    %32 = vadd.xlane.f32.xlu0 %v31
    %v33 = vpop.xlane.xlu0 %32
    %v34 = vsel %vm30, %v29, 0.0
    %35 = vadd.xlane.f32.xlu0 %v34
    %v36 = vpop.xlane.xlu0 %35
    %v37 = vrcp.pop 32.0
    %v38 = vmul.f32 %v33, %v37
    %v39 = vmul.f32 %v36, %v37
    %v40 = vadd.f32 %v38, 1e-06
    %v41 = vadd.f32 %v39, 1e-06
    %v42 = vrsqrt.pop %v40
    %v43 = vrsqrt.pop %v41
    %v44 = vmul.f32 %v26, %v42
    %v45 = vmul.f32 %v27, %v43
    %v46 = vld [vmem:[%s1] sm:$0x1]
    %v48 = vlaneseq
    %v49 = vshrl.u32 %v48, 7
    %v50 = vsub.s32 0, %v49
    %v51 = vrot.slane %v46, %v50
    %v53 = vmul.f32 %v51, %v44
    %v54 = vmul.f32 %v51, %v45
    %55 = vst.msk [vmem:[#allocation5] sm:$0xff] %vm30, %v53
    %56 = vst.msk [vmem:[#allocation5 + $0x8] sm:$0xff] %vm30, %v54
    // Predicated region
    $region14: #{tpu_custom_call.1} parent=1 // pred_check
      _
    $region15: #{tpu_custom_call.1} parent=1 // pred_check_branch
      %58 = sbr.rel (0) target = $region17
    $region16: #{tpu_custom_call.1} parent=1 // pred_region
      %s60 = ssub.s32 256, 256
      %61 = vsyncadd [#allocation4], %s60
      %s62 = sshll.u32 [#allocation5], 4
      %s63 = int_to_ptr.vmem [resolvable:$true] %s62
      %68 = dma.vmem_to_hbm [thread:$0]  %s63, 256, %s2, [#allocation4], 128, 128, 8
    $region17: #{tpu_custom_call.1} parent=1 // pred_fallthru
      _
    // Predicated region
    $region18: #{tpu_custom_call.1} parent=1 // pred_check
      _
    $region19: #{tpu_custom_call.1} parent=1 // pred_check_branch
      %70 = sbr.rel (0) target = $region21
    $region20: #{tpu_custom_call.1} parent=1 // pred_region
      %71 = dma.done [#allocation4], 256
    $region21: #{tpu_custom_call.1} parent=1 // pred_fallthru
      _
    %72 = vsyncpa [#allocation3], 1
    %73 = vsyncpa [#allocation4], 1

</llo_original>
